<compile_context>
chip_gen: v7x
topology: tpu7x:2x2x1
jax: 0.10.0
libtpu: 0.0.40
codegen_flags: <defaults>
</compile_context>

<pallas_src>
import functools

import numpy as np
import jax
import jax.numpy as jnp
from jax.experimental import pallas as pl
from jax.experimental.pallas import tpu as pltpu


SOFTCLIP_MIN = 0.001
_LANES = 128
_SUBLANES = 8

_MAX_BLOCK_ROWS = 1024   # (1024, 128) f32 = 512 KiB per input tile
_MIN_BLOCK_ROWS = 512    # ~85% of HBM roofline per measured tile sweeps
_TARGET_STEPS = 4        # want >= 4 inner steps so the pipeline can overlap DMA


def _cdiv(a, b):
    return -(-a // b)


def _round_up(a, b):
    return _cdiv(a, b) * b


def _limes_kl_kernel(post_loc_ref, prior_loc_ref, prior_scale_ref, out_ref, *,
                     block_rows, num_inner, num_blocks, valid_in_last, mask_tail):
    """Elementwise Laplace-limes KL term + streaming reduction.

    Grid = (outer, inner).  out_ref is a lane-dense (8, 128) f32 block whose
    index only depends on `outer`, so it stays resident across the inner
    (reduction) axis and acts as the accumulator.
    """
    o = pl.program_id(0)
    i = pl.program_id(1)

    @pl.when(i == 0)
    def _init():
        out_ref[...] = jnp.zeros_like(out_ref)

    post_loc = post_loc_ref[...].astype(jnp.float32)
    prior_loc = prior_loc_ref[...].astype(jnp.float32)
    prior_scale = prior_scale_ref[...].astype(jnp.float32)

    loc_abs_diff = jnp.abs(post_loc - prior_loc)
    # softclip(x, m) = m + softplus(x - m)
    scale = SOFTCLIP_MIN + jax.nn.softplus(prior_scale - SOFTCLIP_MIN)
    # TODO(synk): on v7x `loc_abs_diff * pl.reciprocal(scale, approx=True)` saves an
    # EUP op; exact division kept so numerics match the PyTorch module exactly.
    loss = jnp.log(scale) + loc_abs_diff / scale

    if mask_tail:
        # Only the final global block contains invalid (padded / DMA-clamped)
        # elements.  Mask with a block-local flat index (< 2^18, no overflow).
        rows_b, lanes = loss.shape
        local_idx = (jax.lax.broadcasted_iota(jnp.int32, (rows_b, lanes), 0) * lanes
                     + jax.lax.broadcasted_iota(jnp.int32, (rows_b, lanes), 1))
        if num_blocks == 1:
            limit = valid_in_last
        else:
            blk = o * num_inner + i
            limit = jnp.where(blk == num_blocks - 1, valid_in_last, rows_b * lanes)
        loss = jnp.where(local_idx < limit, loss, 0.0)

    # VPU-only per-step accumulation into the resident (8, 128) output block.
    # The reshape groups rows at (8, 128)-tile boundaries, so no cross-lane /
    # cross-sublane work happens inside the loop; the final tiny reduction of
    # the (num_outer*8, 128) partial-sum slab is done host-side.
    out_ref[...] += jnp.sum(
        loss.reshape(block_rows // _SUBLANES, _SUBLANES, _LANES), axis=0)


def _default_num_outer():
    # Two TensorCores per chip only on v7x; on v5e/v6e the split would just add
    # grid bookkeeping (and possibly an extra block), so keep it at 1 there.
    try:
        kind = str(jax.devices()[0].device_kind).lower()
    except Exception:
        return 1
    return 2 if "v7" in kind else 1


def _plan_tiling(n, itemsize, max_block_rows, min_block_rows, target_steps):
    """Choose (block_rows, num_blocks, view_rows) tiling `n` elements tightly."""
    sub = _SUBLANES * (4 // itemsize)               # f32 -> 8, bf16/f16 -> 16
    rows_exact = _cdiv(n, _LANES)
    max_br = max((max_block_rows // sub) * sub, sub)
    if rows_exact <= max_br:
        block_rows = _round_up(rows_exact, sub)     # single block
        num_blocks = 1
        view_rows = block_rows
    else:
        block_rows = _round_up(_cdiv(rows_exact, target_steps), sub)
        block_rows = min(block_rows, max_br)
        block_rows = max(block_rows, min(_round_up(min_block_rows, sub), max_br))
        num_blocks = _cdiv(rows_exact, block_rows)
        view_rows = rows_exact                      # tight: no overshoot blocks
    return block_rows, num_blocks, view_rows


@functools.partial(jax.jit, static_argnames=(
    "data_shape", "max_block_rows", "min_block_rows", "target_steps", "num_outer"))
def limes_kl_divergence(prior_loc, prior_scale, post_loc, *, data_shape,
                        max_block_rows=_MAX_BLOCK_ROWS,
                        min_block_rows=_MIN_BLOCK_ROWS,
                        target_steps=_TARGET_STEPS,
                        num_outer=None):
    """Scalar limes-KL loss (with_stats=False path of LimesKLDivergence)."""
    assert prior_loc.shape == post_loc.shape == prior_scale.shape
    assert prior_loc.dtype == post_loc.dtype == prior_scale.dtype
    itemsize = jnp.dtype(prior_loc.dtype).itemsize
    assert itemsize in (2, 4), "supported dtypes: float32 / bfloat16 / float16"

    batch = prior_loc.shape[0]
    n = int(np.prod(prior_loc.shape))

    block_rows, num_blocks, view_rows = _plan_tiling(
        n, itemsize, max_block_rows, min_block_rows, target_steps)

    if num_outer is None:
        num_outer = _default_num_outer()
    if num_outer > 1 and (num_blocks < 2 * num_outer or num_blocks % num_outer != 0):
        num_outer = 1
    num_inner = num_blocks // num_outer

    view_len = view_rows * _LANES
    block_elems = block_rows * _LANES
    mask_tail = (num_blocks * block_elems != n)
    valid_in_last = n - (num_blocks - 1) * block_elems   # always < 2^18

    def _prep(x):
        if view_len == n:
            # Free bitcast-style reshape: no extra HBM traffic.
            return x.reshape(view_rows, _LANES)
        # Only hit when n % 128 != 0 (or a tiny single odd block): pad to the
        # minimal aligned size.  TODO(synk): a fully copy-free path here would
        # need manual unaligned DMA.
        flat = jnp.pad(x.reshape(-1), (0, view_len - n))
        return flat.reshape(view_rows, _LANES)

    post_loc2 = _prep(post_loc)
    prior_loc2 = _prep(prior_loc)
    prior_scale2 = _prep(prior_scale)

    in_spec = pl.BlockSpec((block_rows, _LANES),
                           lambda o, i: (o * num_inner + i, 0))

    kernel = functools.partial(
        _limes_kl_kernel,
        block_rows=block_rows,
        num_inner=num_inner,
        num_blocks=num_blocks,
        valid_in_last=valid_in_last,
        mask_tail=mask_tail)

    partials = pl.pallas_call(
        kernel,
        out_shape=jax.ShapeDtypeStruct((num_outer * _SUBLANES, _LANES), jnp.float32),
        grid_spec=pltpu.PrefetchScalarGridSpec(
            num_scalar_prefetch=0,
            grid=(num_outer, num_inner),
            in_specs=[in_spec, in_spec, in_spec],
            out_specs=pl.BlockSpec((_SUBLANES, _LANES), lambda o, i: (o, 0)),
        ),
        compiler_params=pltpu.CompilerParams(
            dimension_semantics=("parallel", "arbitrary"),
            vmem_limit_bytes=32 * 1024 * 1024),
    )(post_loc2, prior_loc2, prior_scale2)

    scalar = batch * float(np.prod(data_shape))
    return jnp.sum(partials) / (scalar * np.log(2.0))


def _reference(prior_loc, prior_scale, post_loc, data_shape):
    prior_loc = prior_loc.astype(jnp.float32)
    prior_scale = prior_scale.astype(jnp.float32)
    post_loc = post_loc.astype(jnp.float32)
    loc_abs_diff = jnp.abs(post_loc - prior_loc)
    scale = SOFTCLIP_MIN + jax.nn.softplus(prior_scale - SOFTCLIP_MIN)
    loss = jnp.log(scale) + loc_abs_diff / scale
    per_example = jnp.sum(loss.reshape(loss.shape[0], -1), axis=1)
    batch = loss.shape[0]
    return jnp.sum(per_example) / (batch * float(np.prod(data_shape)) * np.log(2.0))


def _make_inputs(key, shape, dtype=jnp.float32):
    k1, k2, k3 = jax.random.split(key, 3)
    prior_loc = jax.random.normal(k1, shape, dtype=jnp.float32)
    post_loc = jax.random.normal(k2, shape, dtype=jnp.float32)
    # Laplace scale must be positive.
    prior_scale = jax.nn.softplus(
        jax.random.normal(k3, shape, dtype=jnp.float32)) + 0.1
    return (prior_loc.astype(dtype), prior_scale.astype(dtype),
            post_loc.astype(dtype))


if __name__ == "__main__":
    key = jax.random.PRNGKey(0)

    # (shape, data_shape, kwargs, dtype) — exercises:
    #   1) exact-fit single block, zero-copy,
    #   2) n % 128 != 0 -> minimal host pad + in-kernel mask,
    #   3) multi-block with a partially out-of-bounds last block (clamp + mask),
    #   4) multi-block with forced 2-way "parallel" outer split (v7x dual-TC path),
    #   5) bf16 inputs (half HBM bytes), upcast in-kernel.
    cases = [
        ((2, 4, 16, 16), (4, 16, 16), {}, jnp.float32),
        ((2, 3, 15, 15), (3, 15, 15), {}, jnp.float32),
        ((2, 4, 24, 24), (4, 24, 24), dict(max_block_rows=16), jnp.float32),
        ((2, 8, 32, 32), (8, 32, 32), dict(max_block_rows=32, num_outer=2), jnp.float32),
        ((2, 8, 32, 32), (8, 32, 32), {}, jnp.bfloat16),
    ]

    for idx, (shape, data_shape, kwargs, dtype) in enumerate(cases):
        key, sub = jax.random.split(key)
        prior_loc, prior_scale, post_loc = _make_inputs(sub, shape, dtype)

        out = limes_kl_divergence(prior_loc, prior_scale, post_loc,
                                  data_shape=data_shape, **kwargs)
        out = jax.block_until_ready(out)
        ref = _reference(prior_loc, prior_scale, post_loc, data_shape)

        assert np.allclose(np.asarray(out), np.asarray(ref),
                           rtol=1e-4, atol=1e-5), (
            f"MISMATCH case {idx}: kernel={float(out)} ref={float(ref)}")

    print("KERNEL_OK")
</pallas_src>

<mosaic_0001>
module attributes {stable_mosaic.version = 11 : i64} {
  func.func @_limes_kl_kernel(%arg0: i32, %arg1: i32, %arg2: memref<16x128xf32, #tpu.memory_space<vmem>>, %arg3: memref<16x128xf32, #tpu.memory_space<vmem>>, %arg4: memref<16x128xf32, #tpu.memory_space<vmem>>, %arg5: memref<8x128xf32, #tpu.memory_space<vmem>>) attributes {dimension_semantics = [#tpu.dimension_semantics<parallel>, #tpu.dimension_semantics<arbitrary>], iteration_bounds = array<i64: 1, 1>, scalar_prefetch = 0 : i64, scratch_operands = 0 : i64, tpu.core_type = #tpu.core_type<tc>, window_params = [{transform_indices = @transform_0, window_bounds = array<i64: 16, 128>}, {transform_indices = @transform_1, window_bounds = array<i64: 16, 128>}, {transform_indices = @transform_2, window_bounds = array<i64: 16, 128>}, {transform_indices = @transform_3, window_bounds = array<i64: 8, 128>}]} {
    %c0_i32 = arith.constant 0 : i32
    %0 = arith.cmpi eq, %arg1, %c0_i32 : i32
    %1 = arith.extui %0 : i1 to i32
    %c0_i32_0 = arith.constant 0 : i32
    %2 = arith.cmpi ne, %1, %c0_i32_0 : i32
    scf.if %2 {
      %cst_14 = arith.constant 0.000000e+00 : f32
      %34 = vector.broadcast %cst_14 : f32 to vector<8x128xf32>
      %c0_15 = arith.constant 0 : index
      %c0_16 = arith.constant 0 : index
      %35 = vector.load %arg5[%c0_15, %c0_16] : memref<8x128xf32, #tpu.memory_space<vmem>>, vector<8x128xf32>
      tpu.vector_store %arg5[%c0_15, %c0_16], %34 {strides = array<i32>} : memref<8x128xf32, #tpu.memory_space<vmem>>, vector<8x128xf32>,
    } else {
    }
    %c0 = arith.constant 0 : index
    %c0_1 = arith.constant 0 : index
    %3 = vector.load %arg2[%c0, %c0_1] : memref<16x128xf32, #tpu.memory_space<vmem>>, vector<16x128xf32>
    %c0_2 = arith.constant 0 : index
    %c0_3 = arith.constant 0 : index
    %4 = vector.load %arg3[%c0_2, %c0_3] : memref<16x128xf32, #tpu.memory_space<vmem>>, vector<16x128xf32>
    %c0_4 = arith.constant 0 : index
    %c0_5 = arith.constant 0 : index
    %5 = vector.load %arg4[%c0_4, %c0_5] : memref<16x128xf32, #tpu.memory_space<vmem>>, vector<16x128xf32>
    %6 = arith.subf %3, %4 : vector<16x128xf32>
    %7 = math.absf %6 : vector<16x128xf32>
    %cst = arith.constant 1.000000e-03 : f32
    %8 = vector.broadcast %cst : f32 to vector<16x128xf32>
    %9 = arith.subf %5, %8 : vector<16x128xf32>
    %cst_6 = arith.constant 0.000000e+00 : f32
    %10 = vector.broadcast %cst_6 : f32 to vector<16x128xf32>
    %11 = arith.maximumf %9, %10 : vector<16x128xf32>
    %12 = vector.broadcast %cst_6 : f32 to vector<16x128xf32>
    %13 = arith.subf %9, %12 : vector<16x128xf32>
    %14 = arith.cmpf one, %13, %13 : vector<16x128xf32>
    %15 = vector.broadcast %cst_6 : f32 to vector<16x128xf32>
    %16 = arith.addf %9, %15 : vector<16x128xf32>
    %17 = math.absf %13 : vector<16x128xf32>
    %cst_7 = arith.constant 0.000000e+00 : f32
    %18 = vector.broadcast %cst_7 : f32 to vector<16x128xf32>
    %19 = arith.subf %18, %17 : vector<16x128xf32>
    %20 = math.exp %19 : vector<16x128xf32>
    %21 = math.log1p %20 : vector<16x128xf32>
    %22 = arith.addf %11, %21 : vector<16x128xf32>
    %23 = arith.select %14, %16, %22 : vector<16x128xi1>, vector<16x128xf32>
    %cst_8 = arith.constant 1.000000e-03 : f32
    %24 = vector.broadcast %cst_8 : f32 to vector<16x128xf32>
    %25 = arith.addf %24, %23 : vector<16x128xf32>
    %26 = math.log %25 : vector<16x128xf32>
    %27 = arith.divf %7, %25 : vector<16x128xf32>
    %28 = arith.addf %26, %27 : vector<16x128xf32>
    %c0_9 = arith.constant 0 : index
    %c0_10 = arith.constant 0 : index
    %29 = vector.load %arg5[%c0_9, %c0_10] : memref<8x128xf32, #tpu.memory_space<vmem>>, vector<8x128xf32>
    %30 = vector.shape_cast %28 : vector<16x128xf32> to vector<2x8x128xf32>
    %cst_11 = arith.constant dense<0.000000e+00> : vector<8x128xf32>
    %31 = vector.multi_reduction <add>, %30, %cst_11 [0] : vector<2x8x128xf32> to vector<8x128xf32>
    %32 = arith.addf %29, %31 : vector<8x128xf32>
    %c0_12 = arith.constant 0 : index
    %c0_13 = arith.constant 0 : index
    %33 = vector.load %arg5[%c0_12, %c0_13] : memref<8x128xf32, #tpu.memory_space<vmem>>, vector<8x128xf32>
    tpu.vector_store %arg5[%c0_12, %c0_13], %32 {strides = array<i32>} : memref<8x128xf32, #tpu.memory_space<vmem>>, vector<8x128xf32>,
    return
  }
  func.func @transform_0(%arg0: i32, %arg1: i32) -> (i32, i32) {
    %c1_i32 = arith.constant 1 : i32
    %0 = arith.muli %arg0, %c1_i32 : i32
    %1 = arith.addi %0, %arg1 : i32
    %c0_i32 = arith.constant 0 : i32
    %c0_i32_0 = arith.constant 0 : i32
    return %1, %c0_i32 : i32, i32
  }
  func.func @transform_1(%arg0: i32, %arg1: i32) -> (i32, i32) {
    %c1_i32 = arith.constant 1 : i32
    %0 = arith.muli %arg0, %c1_i32 : i32
    %1 = arith.addi %0, %arg1 : i32
    %c0_i32 = arith.constant 0 : i32
    %c0_i32_0 = arith.constant 0 : i32
    return %1, %c0_i32 : i32, i32
  }
  func.func @transform_2(%arg0: i32, %arg1: i32) -> (i32, i32) {
    %c1_i32 = arith.constant 1 : i32
    %0 = arith.muli %arg0, %c1_i32 : i32
    %1 = arith.addi %0, %arg1 : i32
    %c0_i32 = arith.constant 0 : i32
    %c0_i32_0 = arith.constant 0 : i32
    return %1, %c0_i32 : i32, i32
  }
  func.func @transform_3(%arg0: i32, %arg1: i32) -> (i32, i32) {
    %c0_i32 = arith.constant 0 : i32
    %c0_i32_0 = arith.constant 0 : i32
    return %arg0, %c0_i32 : i32, i32
  }
}

</mosaic_0001>

<llo_original>
// kernel: limes_kl_divergence.1
$region0: #{limes_kl_divergence.1}
  #allocation0 [shape = 'u32[]', space=smem, size = 0x4, offset = 0x4, fixed_abs, tag = 'smem constant byte address 0x4 - core index']
  #allocation1 [shape = 'u32[144,128]{1,0:T(1,128)}', space=vmem, size = 0x12000, scoped, tag = 'internal scratch']
  %s0 = inlined_call_operand.vmem [shape: f32[16,128], index: 0, kind: input, shape index: {}]
  %s1 = inlined_call_operand.vmem [shape: f32[16,128], index: 1, kind: input, shape index: {}]
  %s2 = inlined_call_operand.vmem [shape: f32[16,128], index: 2, kind: input, shape index: {}]
  %s3 = inlined_call_operand.vmem [shape: f32[8,128], index: 3, kind: output, shape index: {}]
  %s4 = sld [smem:[#allocation0]]
  $region26: #{limes_kl_divergence.1} parent=0
    _
  %s6 = ssub.s32 1, %s4
  %s7 = scalar_select 0, %s6, %s4
  // Predicated region
  $region2: #{limes_kl_divergence.1} parent=0 // pred_check
    _
  $region3: #{limes_kl_divergence.1} parent=0 // pred_check_branch
    %9 = sbr.rel (0) target = $region5
  $region4: #{limes_kl_divergence.1} parent=0 // pred_region
    %s10 = sadd.s32 0, 0
    %s11 = smul.u32 2, %s10
    %p12 = scmp.lt.s32.totalorder %s11, 1
    %s13 = scalar_select %p12, %s11, 1
    %s14 = smul.addr %s13, 8
    %s15 = scalar_lea.vmem %s0, %s14
    %s16 = sadd.s32 0, 0
    %s17 = smul.u32 2, %s16
  $region5: #{limes_kl_divergence.1} parent=0 // pred_fallthru
    _
  // Predicated region
  $region6: #{limes_kl_divergence.1} parent=0 // pred_check
    _
  $region7: #{limes_kl_divergence.1} parent=0 // pred_check_branch
    %19 = sbr.rel (0) target = $region9
  $region8: #{limes_kl_divergence.1} parent=0 // pred_region
    %s20 = sadd.s32 0, 0
    %s21 = smul.u32 2, %s20
    %p22 = scmp.lt.s32.totalorder %s21, 1
    %s23 = scalar_select %p22, %s21, 1
    %s24 = smul.addr %s23, 8
    %s25 = scalar_lea.vmem %s1, %s24
    %s26 = sadd.s32 0, 0
    %s27 = smul.u32 2, %s26
  $region9: #{limes_kl_divergence.1} parent=0 // pred_fallthru
    _
  // Predicated region
  $region10: #{limes_kl_divergence.1} parent=0 // pred_check
    _
  $region11: #{limes_kl_divergence.1} parent=0 // pred_check_branch
    %29 = sbr.rel (0) target = $region13
  $region12: #{limes_kl_divergence.1} parent=0 // pred_region
    %s30 = sadd.s32 0, 0
    %s31 = smul.u32 2, %s30
    %p32 = scmp.lt.s32.totalorder %s31, 1
    %s33 = scalar_select %p32, %s31, 1
    %s34 = smul.addr %s33, 8
    %s35 = scalar_lea.vmem %s2, %s34
    %s36 = sadd.s32 0, 0
    %s37 = smul.u32 2, %s36
  $region13: #{limes_kl_divergence.1} parent=0 // pred_fallthru
    _
  %s38 = sadd.s32 0, 0
  %s39 = smul.u32 2, %s38
  %p40 = scmp.lt.s32.totalorder %s39, 1
  %s41 = scalar_select %p40, %s39, 1
  %s42 = smul.addr %s41, 8
  %s43 = scalar_lea.vmem %s0, %s42
  %s44 = sadd.s32 0, 0
  %s45 = smul.u32 2, %s44
  %p46 = scmp.lt.s32.totalorder %s45, 1
  %s47 = scalar_select %p46, %s45, 1
  %s48 = smul.addr %s47, 8
  %s49 = scalar_lea.vmem %s1, %s48
  %s50 = sadd.s32 0, 0
  %s51 = smul.u32 2, %s50
  %p52 = scmp.lt.s32.totalorder %s51, 1
  %s53 = scalar_select %p52, %s51, 1
  %s54 = smul.addr %s53, 8
  %s55 = scalar_lea.vmem %s2, %s54
  %s56 = sadd.s32 0, 0
  %s57 = smul.u32 2, %s56
  %p58 = scmp.lt.s32.totalorder %s57, 1
  %s59 = scalar_select %p58, %s57, 1
  %s60 = smul.addr %s59, 8
  %s61 = scalar_lea.vmem %s0, %s60
  %s62 = sadd.s32 0, 0
  %s63 = smul.u32 2, %s62
  %s64 = sadd.s32 0, 0
  %s65 = smul.u32 2, %s64
  %p66 = scmp.lt.s32.totalorder %s65, 1
  %s67 = scalar_select %p66, %s65, 1
  %s68 = smul.addr %s67, 8
  %s69 = scalar_lea.vmem %s1, %s68
  %s70 = sadd.s32 0, 0
  %s71 = smul.u32 2, %s70
  %s72 = sadd.s32 0, 0
  %s73 = smul.u32 2, %s72
  %p74 = scmp.lt.s32.totalorder %s73, 1
  %s75 = scalar_select %p74, %s73, 1
  %s76 = smul.addr %s75, 8
  %s77 = scalar_lea.vmem %s2, %s76
  %s78 = sadd.s32 0, 0
  %s79 = smul.u32 2, %s78
  %p80 = scmp.eq.s32.totalorder 0, 0
  // Predicated region
  $region14: #{limes_kl_divergence.1} parent=0 // pred_check
    %p81 = pneg %p80
  $region15: #{limes_kl_divergence.1} parent=0 // pred_check_branch
    %83 = sbr.rel (%p81) target = $region17
  $region16: #{limes_kl_divergence.1} parent=0 // pred_region
    %84 = vst [vmem:[%s3] sm:$0xff] 0.0
  $region17: #{limes_kl_divergence.1} parent=0 // pred_fallthru
    _
  %v85 = vld [vmem:[%s61] sm:$0xff]
  %v86 = vld [vmem:[%s61 + $0x8] sm:$0xff]
  %v87 = vld [vmem:[%s69] sm:$0xff]
  %v88 = vld [vmem:[%s69 + $0x8] sm:$0xff]
  %v89 = vld [vmem:[%s77] sm:$0xff]
  %v90 = vld [vmem:[%s77 + $0x8] sm:$0xff]
  %v91 = vsub.f32 %v85, %v87
  %v92 = vsub.f32 %v86, %v88
  %v93 = vand.u32 2147483647, %v91
  %v94 = vand.u32 2147483647, %v92
  %v95 = vsub.f32 %v89, 0.001
  %v96 = vsub.f32 %v90, 0.001
  %v97 = vmax.f32 %v95, 0.0
  %v98 = vmax.f32 %v96, 0.0
  %vm99 = vcmp.ne.f32.partialorder %v95, %v95
  %vm100 = vcmp.ne.f32.partialorder %v96, %v96
  %v101 = vadd.f32 %v95, 0.0
  %v102 = vadd.f32 %v96, 0.0
  %v103 = vand.u32 2147483647, %v95
  %v104 = vand.u32 2147483647, %v96
  %v105 = vsub.f32 0.0, %v103
  %v106 = vsub.f32 0.0, %v104
  %v107 = vmul.f32 %v105, 1.442695
  %v108 = vpow.pop %v107
  %v109 = vmul.f32 %v106, 1.442695
  %v110 = vpow.pop %v109
  %v111 = vadd.f32 %v108, 1.0
  %v112 = vlog2.pop %v111
  %v113 = vmul.f32 %v112, 0.6931472
  %v114 = vmul.f32 -0.5, %v108
  %v115 = vadd.f32 %v114, 1.0
  %v116 = vmul.f32 %v115, %v108
  %v117 = vand.u32 2147483647, %v108
  %vm118 = vcmp.lt.f32.partialorder %v117, 0.0004427343
  %v119 = vsel %vm118, %v116, %v113
  %v120 = vadd.f32 %v110, 1.0
  %v121 = vlog2.pop %v120
  %v122 = vmul.f32 %v121, 0.6931472
  %v123 = vmul.f32 -0.5, %v110
  %v124 = vadd.f32 %v123, 1.0
  %v125 = vmul.f32 %v124, %v110
  %v126 = vand.u32 2147483647, %v110
  %vm127 = vcmp.lt.f32.partialorder %v126, 0.0004427343
  %v128 = vsel %vm127, %v125, %v122
  %v129 = vadd.f32 %v97, %v119
  %v130 = vadd.f32 %v98, %v128
  %v131 = vsel %vm99, %v101, %v129
  %v132 = vsel %vm100, %v102, %v130
  %v133 = vadd.f32 %v131, 0.001
  %v134 = vadd.f32 %v132, 0.001
  %v135 = vlog2.pop %v133
  %v136 = vmul.f32 %v135, 0.6931472
  %v137 = vlog2.pop %v134
  %v138 = vmul.f32 %v137, 0.6931472
  %v139 = vrcp.pop %v133
  %v140 = vmul.f32 %v93, %v139
  %v141 = vrcp.pop %v134
  %v142 = vmul.f32 %v94, %v141
  %v143 = vadd.f32 %v136, %v140
  %v144 = vadd.f32 %v138, %v142
  %v145 = vld [vmem:[%s3] sm:$0xff]
  %v146 = vadd.f32 %v143, %v144
  %v147 = vadd.f32 %v145, %v146
  %148 = vst [vmem:[%s3] sm:$0xff] %v147
  // Predicated region
  $region18: #{limes_kl_divergence.1} parent=0 // pred_check
    _
  $region19: #{limes_kl_divergence.1} parent=0 // pred_check_branch
    %150 = sbr.rel (0) target = $region21
  $region20: #{limes_kl_divergence.1} parent=0 // pred_region
    _
  $region21: #{limes_kl_divergence.1} parent=0 // pred_fallthru
    _
  // Predicated region
  $region22: #{limes_kl_divergence.1} parent=0 // pred_check
    _
  $region23: #{limes_kl_divergence.1} parent=0 // pred_check_branch
    %152 = sbr.rel (0) target = $region25
  $region24: #{limes_kl_divergence.1} parent=0 // pred_region
    _
  $region25: #{limes_kl_divergence.1} parent=0 // pred_fallthru
    _

</llo_original>
